<compile_context>
chip_gen: v7x
topology: tpu7x:2x2x1
jax: 0.10.0
libtpu: 0.0.40
codegen_flags: <defaults>
</compile_context>

<pallas_src>
import functools

import jax
import jax.numpy as jnp
from jax.experimental import pallas as pl
from jax.experimental.pallas import tpu as pltpu

_LANE = 128
_SUB = 8
_CHUNK = 512          # rows per in-kernel reduction chunk (256 KiB f32 temps)


def _cdiv(a, b):
    return -(-a // b)


def _device_tuning():
    """(max_tile_rows, vmem_limit_bytes, max_cores) per TPU generation."""
    try:
        kind = jax.devices()[0].device_kind.lower()
    except Exception:
        kind = ""
    if "v7" in kind:
        # v7x: 2 TCs, ~3.2 TB/s HBM, 64 MiB VMEM/TC -> big tiles, modest limit.
        return 8192, 40 << 20, 2
    if "v6" in kind:
        # v6e: 1 TC, ~1.4 TB/s HBM, 128 MiB VMEM -> big tiles, raised limit.
        return 8192, 48 << 20, 1
    # v5e / v5p / v4 / unknown: conservative (v5e scoped-VMEM default ~16 MiB).
    return 2048, None, 1


def _mwmae_kernel(gt_ref, comp_ref, skin_ref, num_ref, den_ref, *,
                  tr, tpc, rows_valid, needs_mask, chunk):
    j = pl.program_id(1)                         # reduction ("arbitrary") axis

    @pl.when(j == 0)
    def _init():
        num_ref[...] = jnp.zeros_like(num_ref)
        den_ref[...] = jnp.zeros_like(den_ref)

    # Logical first row of this tile (logical index: clamped duplicate tiles
    # from an uneven core split land past rows_valid and mask to zero).
    tile_row0 = (pl.program_id(0) * tpc + j) * tr

    def partial_sums(start, nrows, masked):
        # `start`: row offset within the tile (python int, or traced multiple
        # of `chunk`);  `nrows`: static row count (multiple of 8).
        if not isinstance(start, int):
            start = pl.multiple_of(start, chunk)
        gt = gt_ref[pl.ds(start, nrows), :].astype(jnp.float32)
        comp = comp_ref[pl.ds(start, nrows), :].astype(jnp.float32)
        skin = skin_ref[pl.ds(start, nrows), :].astype(jnp.float32)

        sel = gt >= 200.0                        # torch: w[gt >= 200] = 1
        if masked:
            row = jax.lax.broadcasted_iota(jnp.int32, (nrows, _LANE), 0)
            sel = jnp.logical_and(sel, tile_row0 + start + row < rows_valid)

        # Selects (not multiplies): OOB padding (possibly NaN/Inf) stays out.
        sw = jnp.where(sel, skin, 0.0)                    # skin * w
        ad = jnp.where(sel, jnp.abs(gt - comp), 0.0)      # masked |gt - comp|

        # (nrows,128) -> (nrows//8, 8, 128): the axis-0 sum lowers to plain
        # vector adds into a (8,128) vreg-resident partial.
        num = (sw * ad).reshape(nrows // _SUB, _SUB, _LANE).sum(axis=0)
        den = sw.reshape(nrows // _SUB, _SUB, _LANE).sum(axis=0)
        return num, den

    def reduce_tile(masked):
        # Chunked reduction bounds in-kernel temporaries to `chunk` rows
        # regardless of the (large) tile size.
        n_full, rem = divmod(tr, chunk)
        num_acc = jnp.zeros((_SUB, _LANE), jnp.float32)
        den_acc = jnp.zeros((_SUB, _LANE), jnp.float32)
        if n_full > 0:
            def body(c, carry):
                na, da = carry
                pn, pd = partial_sums(c * chunk, chunk, masked)
                return na + pn, da + pd
            num_acc, den_acc = jax.lax.fori_loop(0, n_full, body,
                                                 (num_acc, den_acc))
        if rem > 0:
            pn, pd = partial_sums(n_full * chunk, rem, masked)
            num_acc, den_acc = num_acc + pn, den_acc + pd
        num_ref[...] += num_acc
        den_ref[...] += den_acc

    if needs_mask:
        # Only the ragged last block (and any clamped duplicate blocks) pay
        # for the iota + compare + and; full blocks take the fast path.
        is_full = tile_row0 + tr <= rows_valid

        @pl.when(is_full)
        def _fast():
            reduce_tile(False)

        @pl.when(jnp.logical_not(is_full))
        def _masked():
            reduce_tile(True)
    else:
        reduce_tile(False)


def masked_weighted_mae(gt, comp, skin, mae_weight=1.0):
    assert gt.shape == comp.shape == skin.shape
    n = gt.size

    flat_gt = gt.reshape(-1)
    flat_comp = comp.reshape(-1)
    flat_skin = skin.reshape(-1)

    rows = n // _LANE                       # rows of the lane-dense main slab
    use_kernel = rows >= _SUB
    main_elems = rows * _LANE if use_kernel else 0

    num = jnp.zeros((), jnp.float32)
    den = jnp.zeros((), jnp.float32)

    if use_kernel:
        tr_max, vmem_limit, max_cores = _device_tuning()
        tr = min(tr_max, (rows // _SUB) * _SUB)   # multiple of 8, <= rows

        if main_elems == n:
            # Pure reshape (free for contiguous arrays) -> no extra HBM pass.
            gt2 = flat_gt.reshape(rows, _LANE)
            comp2 = flat_comp.reshape(rows, _LANE)
            skin2 = flat_skin.reshape(rows, _LANE)
            allow_fusion = None
        else:
            # Slice needed only for the <128-element remainder; let XLA fuse
            # it into the kernel's input DMAs instead of materializing it.
            gt2 = flat_gt[:main_elems].reshape(rows, _LANE)
            comp2 = flat_comp[:main_elems].reshape(rows, _LANE)
            skin2 = flat_skin[:main_elems].reshape(rows, _LANE)
            allow_fusion = [True, True, True]

        num_blocks = _cdiv(rows, tr)
        ncores = min(max_cores, num_blocks)        # 2-TC split only on v7x
        tpc = _cdiv(num_blocks, ncores)            # tiles per core
        needs_mask = (rows % tr != 0) or (ncores * tpc != num_blocks)

        if ncores * tpc == num_blocks:
            in_map = lambda c, j: (c * tpc + j, 0)
        else:
            # Clamp duplicate trailing tiles; they are fully masked in-kernel.
            in_map = lambda c, j: (jnp.minimum(c * tpc + j, num_blocks - 1), 0)
        out_map = lambda c, j: (c, 0)

        kernel = functools.partial(_mwmae_kernel, tr=tr, tpc=tpc,
                                   rows_valid=rows, needs_mask=needs_mask,
                                   chunk=_CHUNK)

        num_p, den_p = pl.pallas_call(
            kernel,
            out_shape=(jax.ShapeDtypeStruct((ncores * _SUB, _LANE), jnp.float32),
                       jax.ShapeDtypeStruct((ncores * _SUB, _LANE), jnp.float32)),
            grid_spec=pltpu.PrefetchScalarGridSpec(
                num_scalar_prefetch=0,
                grid=(ncores, tpc),
                in_specs=[pl.BlockSpec((tr, _LANE), in_map),
                          pl.BlockSpec((tr, _LANE), in_map),
                          pl.BlockSpec((tr, _LANE), in_map)],
                out_specs=[pl.BlockSpec((_SUB, _LANE), out_map),
                           pl.BlockSpec((_SUB, _LANE), out_map)]),
            compiler_params=pltpu.CompilerParams(
                dimension_semantics=("parallel", "arbitrary"),
                vmem_limit_bytes=vmem_limit,
                allow_input_fusion=allow_fusion),
        )(gt2, comp2, skin2)

        num = num + jnp.sum(num_p)
        den = den + jnp.sum(den_p)

    if main_elems < n:   # < 128 leftover elements (or tiny input): plain jnp
        tg = flat_gt[main_elems:].astype(jnp.float32)
        tc = flat_comp[main_elems:].astype(jnp.float32)
        ts = flat_skin[main_elems:].astype(jnp.float32)
        sel = tg >= 200.0
        num = num + jnp.sum(jnp.where(sel, ts * jnp.abs(tg - tc), 0.0))
        den = den + jnp.sum(jnp.where(sel, ts, 0.0))

    # NOTE: den == 0 yields NaN/Inf, matching the PyTorch reference semantics.
    return mae_weight * (num / den)


def _reference(gt, comp, skin, mae_weight=1.0):
    gt = gt.astype(jnp.float32)
    comp = comp.astype(jnp.float32)
    skin = skin.astype(jnp.float32)
    abs_diff = jnp.abs(gt - comp)
    w = jnp.where(gt >= 200.0, 1.0, 0.0)
    return mae_weight * jnp.sum(skin * w * abs_diff) / jnp.sum(skin * w)


if __name__ == "__main__":
    key = jax.random.PRNGKey(0)
    k1, k2, k3 = jax.random.split(key, 3)

    # Primary test: NCHW image-like inputs (lane-aligned path).
    shape = (2, 4, 16, 16)
    gt = jax.random.uniform(k1, shape, jnp.float32, 0.0, 255.0)
    comp = jax.random.uniform(k2, shape, jnp.float32, 0.0, 255.0)
    skin = (jax.random.uniform(k3, shape) > 0.5).astype(jnp.float32)

    out = jax.block_until_ready(jax.jit(masked_weighted_mae)(gt, comp, skin, 1.0))
    ref = _reference(gt, comp, skin, 1.0)
    assert jnp.allclose(out, ref, rtol=1e-5, atol=1e-5), (out, ref)

    # Secondary test: ragged size exercises the partial-block mask, fused
    # slice, and sub-lane jnp tail paths.
    shape2 = (3, 5, 7, 11)
    g2 = jax.random.uniform(k1, shape2, jnp.float32, 0.0, 255.0)
    c2 = jax.random.uniform(k2, shape2, jnp.float32, 0.0, 255.0)
    s2 = (jax.random.uniform(k3, shape2) > 0.5).astype(jnp.float32)
    out2 = jax.block_until_ready(jax.jit(masked_weighted_mae)(g2, c2, s2, 0.5))
    ref2 = _reference(g2, c2, s2, 0.5)
    assert jnp.allclose(out2, ref2, rtol=1e-5, atol=1e-5), (out2, ref2)

    print("KERNEL_OK")
</pallas_src>

<mosaic_0001>
module attributes {stable_mosaic.version = 11 : i64} {
  func.func @_mwmae_kernel(%arg0: i32, %arg1: i32, %arg2: memref<16x128xf32, #tpu.memory_space<vmem>>, %arg3: memref<16x128xf32, #tpu.memory_space<vmem>>, %arg4: memref<16x128xf32, #tpu.memory_space<vmem>>, %arg5: memref<8x128xf32, #tpu.memory_space<vmem>>, %arg6: memref<8x128xf32, #tpu.memory_space<vmem>>) attributes {dimension_semantics = [#tpu.dimension_semantics<parallel>, #tpu.dimension_semantics<arbitrary>], iteration_bounds = array<i64: 1, 1>, scalar_prefetch = 0 : i64, scratch_operands = 0 : i64, tpu.core_type = #tpu.core_type<tc>, window_params = [{transform_indices = @transform_0, window_bounds = array<i64: 16, 128>}, {transform_indices = @transform_1, window_bounds = array<i64: 16, 128>}, {transform_indices = @transform_2, window_bounds = array<i64: 16, 128>}, {transform_indices = @transform_3, window_bounds = array<i64: 8, 128>}, {transform_indices = @transform_4, window_bounds = array<i64: 8, 128>}]} {
    %c0_i32 = arith.constant 0 : i32
    %0 = arith.cmpi eq, %arg1, %c0_i32 : i32
    %1 = arith.extui %0 : i1 to i32
    %c0_i32_0 = arith.constant 0 : i32
    %2 = arith.cmpi ne, %1, %c0_i32_0 : i32
    scf.if %2 {
      %cst_20 = arith.constant 0.000000e+00 : f32
      %29 = vector.broadcast %cst_20 : f32 to vector<8x128xf32>
      %c0_21 = arith.constant 0 : index
      %c0_22 = arith.constant 0 : index
      %30 = vector.load %arg5[%c0_21, %c0_22] : memref<8x128xf32, #tpu.memory_space<vmem>>, vector<8x128xf32>
      tpu.vector_store %arg5[%c0_21, %c0_22], %29 {strides = array<i32>} : memref<8x128xf32, #tpu.memory_space<vmem>>, vector<8x128xf32>,
      %cst_23 = arith.constant 0.000000e+00 : f32
      %31 = vector.broadcast %cst_23 : f32 to vector<8x128xf32>
      %c0_24 = arith.constant 0 : index
      %c0_25 = arith.constant 0 : index
      %32 = vector.load %arg6[%c0_24, %c0_25] : memref<8x128xf32, #tpu.memory_space<vmem>>, vector<8x128xf32>
      tpu.vector_store %arg6[%c0_24, %c0_25], %31 {strides = array<i32>} : memref<8x128xf32, #tpu.memory_space<vmem>>, vector<8x128xf32>,
    } else {
    }
    %cst = arith.constant 0.000000e+00 : f32
    %3 = vector.broadcast %cst : f32 to vector<8x128xf32>
    %cst_1 = arith.constant 0.000000e+00 : f32
    %4 = vector.broadcast %cst_1 : f32 to vector<8x128xf32>
    %c0 = arith.constant 0 : index
    %c0_2 = arith.constant 0 : index
    %5 = vector.load %arg2[%c0, %c0_2] : memref<16x128xf32, #tpu.memory_space<vmem>>, vector<16x128xf32>
    %c0_3 = arith.constant 0 : index
    %c0_4 = arith.constant 0 : index
    %6 = vector.load %arg3[%c0_3, %c0_4] : memref<16x128xf32, #tpu.memory_space<vmem>>, vector<16x128xf32>
    %c0_5 = arith.constant 0 : index
    %c0_6 = arith.constant 0 : index
    %7 = vector.load %arg4[%c0_5, %c0_6] : memref<16x128xf32, #tpu.memory_space<vmem>>, vector<16x128xf32>
    %cst_7 = arith.constant 2.000000e+02 : f32
    %8 = vector.broadcast %cst_7 : f32 to vector<16x128xf32>
    %9 = arith.cmpf oge, %5, %8 : vector<16x128xf32>
    %cst_8 = arith.constant 0.000000e+00 : f32
    %10 = vector.broadcast %cst_8 : f32 to vector<16x128xf32>
    %11 = arith.select %9, %7, %10 : vector<16x128xi1>, vector<16x128xf32>
    %12 = arith.subf %5, %6 : vector<16x128xf32>
    %13 = math.absf %12 : vector<16x128xf32>
    %cst_9 = arith.constant 0.000000e+00 : f32
    %14 = vector.broadcast %cst_9 : f32 to vector<16x128xf32>
    %15 = arith.select %9, %13, %14 : vector<16x128xi1>, vector<16x128xf32>
    %16 = arith.mulf %11, %15 : vector<16x128xf32>
    %17 = vector.shape_cast %16 : vector<16x128xf32> to vector<2x8x128xf32>
    %cst_10 = arith.constant dense<0.000000e+00> : vector<8x128xf32>
    %18 = vector.multi_reduction <add>, %17, %cst_10 [0] : vector<2x8x128xf32> to vector<8x128xf32>
    %19 = vector.shape_cast %11 : vector<16x128xf32> to vector<2x8x128xf32>
    %cst_11 = arith.constant dense<0.000000e+00> : vector<8x128xf32>
    %20 = vector.multi_reduction <add>, %19, %cst_11 [0] : vector<2x8x128xf32> to vector<8x128xf32>
    %21 = arith.addf %3, %18 : vector<8x128xf32>
    %22 = arith.addf %4, %20 : vector<8x128xf32>
    %c0_12 = arith.constant 0 : index
    %c0_13 = arith.constant 0 : index
    %23 = vector.load %arg5[%c0_12, %c0_13] : memref<8x128xf32, #tpu.memory_space<vmem>>, vector<8x128xf32>
    %24 = arith.addf %23, %21 : vector<8x128xf32>
    %c0_14 = arith.constant 0 : index
    %c0_15 = arith.constant 0 : index
    %25 = vector.load %arg5[%c0_14, %c0_15] : memref<8x128xf32, #tpu.memory_space<vmem>>, vector<8x128xf32>
    tpu.vector_store %arg5[%c0_14, %c0_15], %24 {strides = array<i32>} : memref<8x128xf32, #tpu.memory_space<vmem>>, vector<8x128xf32>,
    %c0_16 = arith.constant 0 : index
    %c0_17 = arith.constant 0 : index
    %26 = vector.load %arg6[%c0_16, %c0_17] : memref<8x128xf32, #tpu.memory_space<vmem>>, vector<8x128xf32>
    %27 = arith.addf %26, %22 : vector<8x128xf32>
    %c0_18 = arith.constant 0 : index
    %c0_19 = arith.constant 0 : index
    %28 = vector.load %arg6[%c0_18, %c0_19] : memref<8x128xf32, #tpu.memory_space<vmem>>, vector<8x128xf32>
    tpu.vector_store %arg6[%c0_18, %c0_19], %27 {strides = array<i32>} : memref<8x128xf32, #tpu.memory_space<vmem>>, vector<8x128xf32>,
    return
  }
  func.func @transform_0(%arg0: i32, %arg1: i32) -> (i32, i32) {
    %c1_i32 = arith.constant 1 : i32
    %0 = arith.muli %arg0, %c1_i32 : i32
    %1 = arith.addi %0, %arg1 : i32
    %c0_i32 = arith.constant 0 : i32
    %c0_i32_0 = arith.constant 0 : i32
    return %1, %c0_i32 : i32, i32
  }
  func.func @transform_1(%arg0: i32, %arg1: i32) -> (i32, i32) {
    %c1_i32 = arith.constant 1 : i32
    %0 = arith.muli %arg0, %c1_i32 : i32
    %1 = arith.addi %0, %arg1 : i32
    %c0_i32 = arith.constant 0 : i32
    %c0_i32_0 = arith.constant 0 : i32
    return %1, %c0_i32 : i32, i32
  }
  func.func @transform_2(%arg0: i32, %arg1: i32) -> (i32, i32) {
    %c1_i32 = arith.constant 1 : i32
    %0 = arith.muli %arg0, %c1_i32 : i32
    %1 = arith.addi %0, %arg1 : i32
    %c0_i32 = arith.constant 0 : i32
    %c0_i32_0 = arith.constant 0 : i32
    return %1, %c0_i32 : i32, i32
  }
  func.func @transform_3(%arg0: i32, %arg1: i32) -> (i32, i32) {
    %c0_i32 = arith.constant 0 : i32
    %c0_i32_0 = arith.constant 0 : i32
    return %arg0, %c0_i32 : i32, i32
  }
  func.func @transform_4(%arg0: i32, %arg1: i32) -> (i32, i32) {
    %c0_i32 = arith.constant 0 : i32
    %c0_i32_0 = arith.constant 0 : i32
    return %arg0, %c0_i32 : i32, i32
  }
}

</mosaic_0001>

<llo_original>
// kernel: masked_weighted_mae.1
$region0: #{masked_weighted_mae.1}
  #allocation0 [shape = 'u32[]', space=smem, size = 0x4, offset = 0x4, fixed_abs, tag = 'smem constant byte address 0x4 - core index']
  #allocation1 [shape = 'u32[144,128]{1,0:T(1,128)}', space=vmem, size = 0x12000, scoped, tag = 'internal scratch']
  %s0 = inlined_call_operand.vmem [shape: f32[16,128], index: 0, kind: input, shape index: {}]
  %s1 = inlined_call_operand.vmem [shape: f32[16,128], index: 1, kind: input, shape index: {}]
  %s2 = inlined_call_operand.vmem [shape: f32[16,128], index: 2, kind: input, shape index: {}]
  %s3 = inlined_call_operand.vmem [shape: f32[8,128], index: 3, kind: output, shape index: {0}]
  %s4 = inlined_call_operand.vmem [shape: f32[8,128], index: 4, kind: output, shape index: {1}]
  %5 = xla_tuple %s3, %s4
  %s6 = sld [smem:[#allocation0]]
  $region34: #{masked_weighted_mae.1} parent=0
    _
  %s8 = ssub.s32 1, %s6
  %s9 = scalar_select 0, %s8, %s6
  // Predicated region
  $region2: #{masked_weighted_mae.1} parent=0 // pred_check
    _
  $region3: #{masked_weighted_mae.1} parent=0 // pred_check_branch
    %11 = sbr.rel (0) target = $region5
  $region4: #{masked_weighted_mae.1} parent=0 // pred_region
    %s12 = sadd.s32 0, 0
    %s13 = smul.u32 2, %s12
    %p14 = scmp.lt.s32.totalorder %s13, 1
    %s15 = scalar_select %p14, %s13, 1
    %s16 = smul.addr %s15, 8
    %s17 = scalar_lea.vmem %s0, %s16
    %s18 = sadd.s32 0, 0
    %s19 = smul.u32 2, %s18
  $region5: #{masked_weighted_mae.1} parent=0 // pred_fallthru
    _
  // Predicated region
  $region6: #{masked_weighted_mae.1} parent=0 // pred_check
    _
  $region7: #{masked_weighted_mae.1} parent=0 // pred_check_branch
    %21 = sbr.rel (0) target = $region9
  $region8: #{masked_weighted_mae.1} parent=0 // pred_region
    %s22 = sadd.s32 0, 0
    %s23 = smul.u32 2, %s22
    %p24 = scmp.lt.s32.totalorder %s23, 1
    %s25 = scalar_select %p24, %s23, 1
    %s26 = smul.addr %s25, 8
    %s27 = scalar_lea.vmem %s1, %s26
    %s28 = sadd.s32 0, 0
    %s29 = smul.u32 2, %s28
  $region9: #{masked_weighted_mae.1} parent=0 // pred_fallthru
    _
  // Predicated region
  $region10: #{masked_weighted_mae.1} parent=0 // pred_check
    _
  $region11: #{masked_weighted_mae.1} parent=0 // pred_check_branch
    %31 = sbr.rel (0) target = $region13
  $region12: #{masked_weighted_mae.1} parent=0 // pred_region
    %s32 = sadd.s32 0, 0
    %s33 = smul.u32 2, %s32
    %p34 = scmp.lt.s32.totalorder %s33, 1
    %s35 = scalar_select %p34, %s33, 1
    %s36 = smul.addr %s35, 8
    %s37 = scalar_lea.vmem %s2, %s36
    %s38 = sadd.s32 0, 0
    %s39 = smul.u32 2, %s38
  $region13: #{masked_weighted_mae.1} parent=0 // pred_fallthru
    _
  %s40 = sadd.s32 0, 0
  %s41 = smul.u32 2, %s40
  %p42 = scmp.lt.s32.totalorder %s41, 1
  %s43 = scalar_select %p42, %s41, 1
  %s44 = smul.addr %s43, 8
  %s45 = scalar_lea.vmem %s0, %s44
  %s46 = sadd.s32 0, 0
  %s47 = smul.u32 2, %s46
  %p48 = scmp.lt.s32.totalorder %s47, 1
  %s49 = scalar_select %p48, %s47, 1
  %s50 = smul.addr %s49, 8
  %s51 = scalar_lea.vmem %s1, %s50
  %s52 = sadd.s32 0, 0
  %s53 = smul.u32 2, %s52
  %p54 = scmp.lt.s32.totalorder %s53, 1
  %s55 = scalar_select %p54, %s53, 1
  %s56 = smul.addr %s55, 8
  %s57 = scalar_lea.vmem %s2, %s56
  %s58 = sadd.s32 0, 0
  %s59 = smul.u32 2, %s58
  %p60 = scmp.lt.s32.totalorder %s59, 1
  %s61 = scalar_select %p60, %s59, 1
  %s62 = smul.addr %s61, 8
  %s63 = scalar_lea.vmem %s0, %s62
  %s64 = sadd.s32 0, 0
  %s65 = smul.u32 2, %s64
  %s66 = sadd.s32 0, 0
  %s67 = smul.u32 2, %s66
  %p68 = scmp.lt.s32.totalorder %s67, 1
  %s69 = scalar_select %p68, %s67, 1
  %s70 = smul.addr %s69, 8
  %s71 = scalar_lea.vmem %s1, %s70
  %s72 = sadd.s32 0, 0
  %s73 = smul.u32 2, %s72
  %s74 = sadd.s32 0, 0
  %s75 = smul.u32 2, %s74
  %p76 = scmp.lt.s32.totalorder %s75, 1
  %s77 = scalar_select %p76, %s75, 1
  %s78 = smul.addr %s77, 8
  %s79 = scalar_lea.vmem %s2, %s78
  %s80 = sadd.s32 0, 0
  %s81 = smul.u32 2, %s80
  %p82 = scmp.eq.s32.totalorder 0, 0
  // Predicated region
  $region14: #{masked_weighted_mae.1} parent=0 // pred_check
    %p83 = pneg %p82
  $region15: #{masked_weighted_mae.1} parent=0 // pred_check_branch
    %85 = sbr.rel (%p83) target = $region17
  $region16: #{masked_weighted_mae.1} parent=0 // pred_region
    %86 = vst [vmem:[%s3] sm:$0xff] 0.0
    %87 = vst [vmem:[%s4] sm:$0xff] 0.0
  $region17: #{masked_weighted_mae.1} parent=0 // pred_fallthru
    _
  %v88 = vld [vmem:[%s63] sm:$0xff]
  %v89 = vld [vmem:[%s63 + $0x8] sm:$0xff]
  %v90 = vld [vmem:[%s71] sm:$0xff]
  %v91 = vld [vmem:[%s71 + $0x8] sm:$0xff]
  %v92 = vld [vmem:[%s79] sm:$0xff]
  %v93 = vld [vmem:[%s79 + $0x8] sm:$0xff]
  %vm94 = vcmp.ge.f32.partialorder %v88, 200.0
  %vm95 = vcmp.ge.f32.partialorder %v89, 200.0
  %v96 = vsel %vm94, %v92, 0.0
  %v97 = vsel %vm95, %v93, 0.0
  %v98 = vsub.f32 %v88, %v90
  %v99 = vsub.f32 %v89, %v91
  %v100 = vand.u32 2147483647, %v98
  %v101 = vand.u32 2147483647, %v99
  %v102 = vsel %vm94, %v100, 0.0
  %v103 = vsel %vm95, %v101, 0.0
  %v104 = vmul.f32 %v96, %v102
  %v105 = vmul.f32 %v97, %v103
  %v106 = vadd.f32 %v104, %v105
  %v107 = vadd.f32 %v96, %v97
  %v108 = vadd.f32 %v106, 0.0
  %v109 = vadd.f32 %v107, 0.0
  %v110 = vld [vmem:[%s3] sm:$0xff]
  %v111 = vadd.f32 %v110, %v108
  %112 = vst [vmem:[%s3] sm:$0xff] %v111
  %v113 = vld [vmem:[%s4] sm:$0xff]
  %v114 = vadd.f32 %v113, %v109
  %115 = vst [vmem:[%s4] sm:$0xff] %v114
  // Predicated region
  $region18: #{masked_weighted_mae.1} parent=0 // pred_check
    _
  $region19: #{masked_weighted_mae.1} parent=0 // pred_check_branch
    %117 = sbr.rel (0) target = $region21
  $region20: #{masked_weighted_mae.1} parent=0 // pred_region
    _
  $region21: #{masked_weighted_mae.1} parent=0 // pred_fallthru
    _
  // Predicated region
  $region22: #{masked_weighted_mae.1} parent=0 // pred_check
    _
  $region23: #{masked_weighted_mae.1} parent=0 // pred_check_branch
    %119 = sbr.rel (0) target = $region25
  $region24: #{masked_weighted_mae.1} parent=0 // pred_region
    _
  $region25: #{masked_weighted_mae.1} parent=0 // pred_fallthru
    _
  // Predicated region
  $region26: #{masked_weighted_mae.1} parent=0 // pred_check
    _
  $region27: #{masked_weighted_mae.1} parent=0 // pred_check_branch
    %121 = sbr.rel (0) target = $region29
  $region28: #{masked_weighted_mae.1} parent=0 // pred_region
    _
  $region29: #{masked_weighted_mae.1} parent=0 // pred_fallthru
    _
  // Predicated region
  $region30: #{masked_weighted_mae.1} parent=0 // pred_check
    _
  $region31: #{masked_weighted_mae.1} parent=0 // pred_check_branch
    %123 = sbr.rel (0) target = $region33
  $region32: #{masked_weighted_mae.1} parent=0 // pred_region
    _
  $region33: #{masked_weighted_mae.1} parent=0 // pred_fallthru
    _

</llo_original>
